<compile_context>
chip_gen: v7x
topology: tpu7x:2x2x1
jax: 0.10.0
libtpu: 0.0.40
codegen_flags: <defaults>
</compile_context>

<pallas_src>
import functools

import jax
import jax.numpy as jnp
from jax.experimental import pallas as pl
from jax.experimental.pallas import tpu as pltpu


def _make_vae_kernel(z_dim: int, lat_pad: int):
    def kernel(
        x_ref, eps_ref,
        we1, be1, we2, be2, we3, be3, we4, be4,
        wmv, bmv,
        wd1, bd1, wd2, bd2, wd3, bd3, wd4, bd4, wd5, bd5,
        xrec_ref, lat_ref,
    ):
        def linear(h, w_ref, b_ref):
            # bf16 MXU operands, f32 accumulation, f32 bias add.
            return (
                jnp.dot(h.astype(jnp.bfloat16), w_ref[...],
                        preferred_element_type=jnp.float32)
                + b_ref[...]
            )

        def linear_relu(h, w_ref, b_ref):
            return jnp.maximum(linear(h, w_ref, b_ref), 0.0)

        # ---- encoder trunk ----
        h = x_ref[...]
        h = linear_relu(h, we1, be1)
        h = linear_relu(h, we2, be2)
        h = linear_relu(h, we3, be3)
        h = linear_relu(h, we4, be4)

        # ---- fused mean/var head ----
        mv = linear(h, wmv, bmv)            # [TILE_B, 2*z_dim]
        mean = mv[:, :z_dim]
        var = mv[:, z_dim:2 * z_dim]        # log-variance, as in the torch code

        # ---- reparameterization: z = mean + eps * exp(0.5 * var) (f32 VPU/EUP) ----
        z = mean + eps_ref[...] * jnp.exp(0.5 * var)

        # ---- decoder ----
        d = linear_relu(z, wd1, bd1)
        d = linear_relu(d, wd2, bd2)
        d = linear_relu(d, wd3, bd3)
        d = linear_relu(d, wd4, bd4)
        xrec_ref[...] = linear(d, wd5, bd5)   # wd5/bd5 zero-padded to 128 lanes

        # ---- lane-dense latent slab: [ mean | var | z | 0-pad ] written once ----
        tb = mean.shape[0]
        parts = [mean, var, z]
        if lat_pad > 3 * z_dim:
            parts.append(jnp.zeros((tb, lat_pad - 3 * z_dim), jnp.float32))
        lat_ref[...] = jnp.concatenate(parts, axis=-1)

    return kernel


def vae_forward(x, eps, params):
    """x: [B, 50] f32, eps: [B, z_dim] f32, params: list of 11 (W[in,out], b[out])."""
    B, in_dim = x.shape
    z_dim = eps.shape[1]
    out_dim = params[10][0].shape[1]  # 50

    # --- fuse mean/var heads into one matmul ---
    (wm, bm), (wv, bv) = params[4], params[5]
    wmv = jnp.concatenate([wm, wv], axis=1)          # [s4, 2*z_dim]
    bmv = jnp.concatenate([bm, bv], axis=0)          # [2*z_dim]

    # --- pad the last decoder layer so xrec is a lane-dense (128-wide) store ---
    XREC_PAD = -(-out_dim // 128) * 128
    wd5, bd5 = params[10]
    wd5_p = jnp.pad(wd5, ((0, 0), (0, XREC_PAD - out_dim)))
    bd5_p = jnp.pad(bd5, (0, XREC_PAD - out_dim))

    fused = list(params[:4]) + [(wmv, bmv)] + list(params[6:10]) + [(wd5_p, bd5_p)]

    flat = []
    for w, b in fused:
        flat.append(w.astype(jnp.bfloat16))                 # MXU operands in bf16
        flat.append(b.reshape(1, -1).astype(jnp.float32))   # biases stay f32

    LAT_PAD = max(128, -(-3 * z_dim // 128) * 128)

    # --- batch tiling: multiples of 8 (f32 sublane), up to 256 rows per tile ---
    B8 = -(-B // 8) * 8
    TILE_B = min(256, B8)
    B_pad = -(-B8 // TILE_B) * TILE_B
    if B_pad != B:
        x = jnp.pad(x, ((0, B_pad - B), (0, 0)))
        eps = jnp.pad(eps, ((0, B_pad - B), (0, 0)))
    grid = (B_pad // TILE_B,)

    def act_spec(feat):
        return pl.BlockSpec((TILE_B, feat), lambda i: (i, 0))

    def const_spec(arr):
        # Full-array block, constant index -> stays VMEM-resident across the grid.
        return pl.BlockSpec(arr.shape, lambda i: (0, 0))

    in_specs = [act_spec(in_dim), act_spec(z_dim)] + [const_spec(a) for a in flat]
    out_specs = (
        pl.BlockSpec((TILE_B, XREC_PAD), lambda i: (i, 0)),
        pl.BlockSpec((TILE_B, LAT_PAD), lambda i: (i, 0)),
    )
    out_shapes = (
        jax.ShapeDtypeStruct((B_pad, XREC_PAD), jnp.float32),
        jax.ShapeDtypeStruct((B_pad, LAT_PAD), jnp.float32),
    )

    xrec_pad, lat = pl.pallas_call(
        _make_vae_kernel(z_dim, LAT_PAD),
        out_shape=out_shapes,
        grid=grid,
        in_specs=in_specs,
        out_specs=out_specs,
        compiler_params=pltpu.CompilerParams(
            dimension_semantics=("parallel",),
        ),
    )(x, eps, *flat)

    xrec = xrec_pad[:B, :out_dim]
    mean = lat[:B, :z_dim]
    var = lat[:B, z_dim:2 * z_dim]
    z = lat[:B, 2 * z_dim:3 * z_dim]
    return xrec, mean, var, z


def init_params(key, z_dim, s1, s2, s3, s4):
    """Deterministic init mirroring nn.Linear default: U(-1/sqrt(fan_in), 1/sqrt(fan_in)).
    Weights stored as [in, out]."""
    dims = [
        (50, s1), (s1, s2), (s2, s3), (s3, s4),               # encoder trunk
        (s4, z_dim), (s4, z_dim),                              # mean / var heads
        (z_dim, s4), (s4, s3), (s3, s2), (s2, s1), (s1, 50),   # decoder
    ]
    params = []
    for fan_in, fan_out in dims:
        key, kw, kb = jax.random.split(key, 3)
        bound = 1.0 / jnp.sqrt(float(fan_in))
        w = jax.random.uniform(kw, (fan_in, fan_out), jnp.float32, -bound, bound)
        b = jax.random.uniform(kb, (fan_out,), jnp.float32, -bound, bound)
        params.append((w, b))
    return params


def vae_reference(x, eps, params):
    """Pure-JAX reference with the same bf16-operand / f32-accumulate matmul semantics."""
    def lin(h, w, b):
        return jnp.dot(h.astype(jnp.bfloat16), w.astype(jnp.bfloat16),
                       preferred_element_type=jnp.float32) + b

    h = x
    for w, b in params[0:4]:
        h = jnp.maximum(lin(h, w, b), 0.0)
    mean = lin(h, *params[4])
    var = lin(h, *params[5])
    z = mean + eps * jnp.exp(0.5 * var)
    d = z
    for w, b in params[6:10]:
        d = jnp.maximum(lin(d, w, b), 0.0)
    xrec = lin(d, *params[10])
    return xrec, mean, var, z


if __name__ == "__main__":
    # Small, forward-consistent shapes.
    B = 8
    z_dim, s1, s2, s3, s4 = 8, 64, 48, 32, 16

    key = jax.random.PRNGKey(0)
    key, kx, ke, kp = jax.random.split(key, 4)

    x = jax.random.normal(kx, (B, 50), jnp.float32)
    eps = jax.random.normal(ke, (B, z_dim), jnp.float32)
    params = init_params(kp, z_dim, s1, s2, s3, s4)

    xrec, mean, var, z = jax.block_until_ready(vae_forward(x, eps, params))

    # Sanity check against pure-JAX reference (same bf16 matmul-operand casts).
    r_xrec, r_mean, r_var, r_z = vae_reference(x, eps, params)
    assert jnp.allclose(xrec, r_xrec, atol=2e-3, rtol=2e-3)
    assert jnp.allclose(mean, r_mean, atol=2e-3, rtol=2e-3)
    assert jnp.allclose(var, r_var, atol=2e-3, rtol=2e-3)
    assert jnp.allclose(z, r_z, atol=2e-3, rtol=2e-3)

    print("KERNEL_OK")
</pallas_src>

<mosaic_0001>
module attributes {stable_mosaic.version = 11 : i64} {
  func.func @kernel(%arg0: i32, %arg1: memref<8x50xf32, #tpu.memory_space<vmem>>, %arg2: memref<8x8xf32, #tpu.memory_space<vmem>>, %arg3: memref<50x64xbf16, #tpu.memory_space<vmem>>, %arg4: memref<1x64xf32, #tpu.memory_space<vmem>>, %arg5: memref<64x48xbf16, #tpu.memory_space<vmem>>, %arg6: memref<1x48xf32, #tpu.memory_space<vmem>>, %arg7: memref<48x32xbf16, #tpu.memory_space<vmem>>, %arg8: memref<1x32xf32, #tpu.memory_space<vmem>>, %arg9: memref<32x16xbf16, #tpu.memory_space<vmem>>, %arg10: memref<1x16xf32, #tpu.memory_space<vmem>>, %arg11: memref<16x16xbf16, #tpu.memory_space<vmem>>, %arg12: memref<1x16xf32, #tpu.memory_space<vmem>>, %arg13: memref<8x16xbf16, #tpu.memory_space<vmem>>, %arg14: memref<1x16xf32, #tpu.memory_space<vmem>>, %arg15: memref<16x32xbf16, #tpu.memory_space<vmem>>, %arg16: memref<1x32xf32, #tpu.memory_space<vmem>>, %arg17: memref<32x48xbf16, #tpu.memory_space<vmem>>, %arg18: memref<1x48xf32, #tpu.memory_space<vmem>>, %arg19: memref<48x64xbf16, #tpu.memory_space<vmem>>, %arg20: memref<1x64xf32, #tpu.memory_space<vmem>>, %arg21: memref<64x128xbf16, #tpu.memory_space<vmem>>, %arg22: memref<1x128xf32, #tpu.memory_space<vmem>>, %arg23: memref<8x128xf32, #tpu.memory_space<vmem>>, %arg24: memref<8x128xf32, #tpu.memory_space<vmem>>) attributes {dimension_semantics = [#tpu.dimension_semantics<parallel>], iteration_bounds = array<i64: 1>, scalar_prefetch = 0 : i64, scratch_operands = 0 : i64, tpu.core_type = #tpu.core_type<tc>, window_params = [{transform_indices = @transform_0, window_bounds = array<i64: 8, 50>}, {transform_indices = @transform_1, window_bounds = array<i64: 8, 8>}, {pipeline_mode = #tpu.pipeline_mode<synchronous>, transform_indices = @transform_2, window_bounds = array<i64: 50, 64>}, {pipeline_mode = #tpu.pipeline_mode<synchronous>, transform_indices = @transform_3, window_bounds = array<i64: 1, 64>}, {pipeline_mode = #tpu.pipeline_mode<synchronous>, transform_indices = @transform_4, window_bounds = array<i64: 64, 48>}, {pipeline_mode = #tpu.pipeline_mode<synchronous>, transform_indices = @transform_5, window_bounds = array<i64: 1, 48>}, {pipeline_mode = #tpu.pipeline_mode<synchronous>, transform_indices = @transform_6, window_bounds = array<i64: 48, 32>}, {pipeline_mode = #tpu.pipeline_mode<synchronous>, transform_indices = @transform_7, window_bounds = array<i64: 1, 32>}, {pipeline_mode = #tpu.pipeline_mode<synchronous>, transform_indices = @transform_8, window_bounds = array<i64: 32, 16>}, {pipeline_mode = #tpu.pipeline_mode<synchronous>, transform_indices = @transform_9, window_bounds = array<i64: 1, 16>}, {pipeline_mode = #tpu.pipeline_mode<synchronous>, transform_indices = @transform_10, window_bounds = array<i64: 16, 16>}, {pipeline_mode = #tpu.pipeline_mode<synchronous>, transform_indices = @transform_11, window_bounds = array<i64: 1, 16>}, {pipeline_mode = #tpu.pipeline_mode<synchronous>, transform_indices = @transform_12, window_bounds = array<i64: 8, 16>}, {pipeline_mode = #tpu.pipeline_mode<synchronous>, transform_indices = @transform_13, window_bounds = array<i64: 1, 16>}, {pipeline_mode = #tpu.pipeline_mode<synchronous>, transform_indices = @transform_14, window_bounds = array<i64: 16, 32>}, {pipeline_mode = #tpu.pipeline_mode<synchronous>, transform_indices = @transform_15, window_bounds = array<i64: 1, 32>}, {pipeline_mode = #tpu.pipeline_mode<synchronous>, transform_indices = @transform_16, window_bounds = array<i64: 32, 48>}, {pipeline_mode = #tpu.pipeline_mode<synchronous>, transform_indices = @transform_17, window_bounds = array<i64: 1, 48>}, {pipeline_mode = #tpu.pipeline_mode<synchronous>, transform_indices = @transform_18, window_bounds = array<i64: 48, 64>}, {pipeline_mode = #tpu.pipeline_mode<synchronous>, transform_indices = @transform_19, window_bounds = array<i64: 1, 64>}, {pipeline_mode = #tpu.pipeline_mode<synchronous>, transform_indices = @transform_20, window_bounds = array<i64: 64, 128>}, {pipeline_mode = #tpu.pipeline_mode<synchronous>, transform_indices = @transform_21, window_bounds = array<i64: 1, 128>}, {transform_indices = @transform_22, window_bounds = array<i64: 8, 128>}, {transform_indices = @transform_23, window_bounds = array<i64: 8, 128>}]} {
    %c0 = arith.constant 0 : index
    %c0_0 = arith.constant 0 : index
    %0 = vector.load %arg1[%c0, %c0_0] : memref<8x50xf32, #tpu.memory_space<vmem>>, vector<8x50xf32>
    %1 = arith.truncf %0 : vector<8x50xf32> to vector<8x50xbf16>
    %c0_1 = arith.constant 0 : index
    %c0_2 = arith.constant 0 : index
    %2 = vector.load %arg3[%c0_1, %c0_2] : memref<50x64xbf16, #tpu.memory_space<vmem>>, vector<50x64xbf16>
    %cst = arith.constant dense<0.000000e+00> : vector<8x64xf32>
    %3 = tpu.matmul %1, %2, %cst {dimension_numbers = #tpu.dot_dimension_numbers<[1], [0], [0], [1], [0, 0, 1, 1], [], []>} : vector<8x50xbf16>, vector<50x64xbf16>, vector<8x64xf32> -> vector<8x64xf32>
    %c0_3 = arith.constant 0 : index
    %c0_4 = arith.constant 0 : index
    %4 = vector.load %arg4[%c0_3, %c0_4] : memref<1x64xf32, #tpu.memory_space<vmem>>, vector<1x64xf32>
    %5 = vector.broadcast %4 : vector<1x64xf32> to vector<8x64xf32>
    %6 = arith.addf %3, %5 : vector<8x64xf32>
    %cst_5 = arith.constant 0.000000e+00 : f32
    %7 = vector.broadcast %cst_5 : f32 to vector<8x64xf32>
    %8 = arith.maximumf %6, %7 : vector<8x64xf32>
    %9 = arith.truncf %8 : vector<8x64xf32> to vector<8x64xbf16>
    %c0_6 = arith.constant 0 : index
    %c0_7 = arith.constant 0 : index
    %10 = vector.load %arg5[%c0_6, %c0_7] : memref<64x48xbf16, #tpu.memory_space<vmem>>, vector<64x48xbf16>
    %cst_8 = arith.constant dense<0.000000e+00> : vector<8x48xf32>
    %11 = tpu.matmul %9, %10, %cst_8 {dimension_numbers = #tpu.dot_dimension_numbers<[1], [0], [0], [1], [0, 0, 1, 1], [], []>} : vector<8x64xbf16>, vector<64x48xbf16>, vector<8x48xf32> -> vector<8x48xf32>
    %c0_9 = arith.constant 0 : index
    %c0_10 = arith.constant 0 : index
    %12 = vector.load %arg6[%c0_9, %c0_10] : memref<1x48xf32, #tpu.memory_space<vmem>>, vector<1x48xf32>
    %13 = vector.broadcast %12 : vector<1x48xf32> to vector<8x48xf32>
    %14 = arith.addf %11, %13 : vector<8x48xf32>
    %cst_11 = arith.constant 0.000000e+00 : f32
    %15 = vector.broadcast %cst_11 : f32 to vector<8x48xf32>
    %16 = arith.maximumf %14, %15 : vector<8x48xf32>
    %17 = arith.truncf %16 : vector<8x48xf32> to vector<8x48xbf16>
    %c0_12 = arith.constant 0 : index
    %c0_13 = arith.constant 0 : index
    %18 = vector.load %arg7[%c0_12, %c0_13] : memref<48x32xbf16, #tpu.memory_space<vmem>>, vector<48x32xbf16>
    %cst_14 = arith.constant dense<0.000000e+00> : vector<8x32xf32>
    %19 = tpu.matmul %17, %18, %cst_14 {dimension_numbers = #tpu.dot_dimension_numbers<[1], [0], [0], [1], [0, 0, 1, 1], [], []>} : vector<8x48xbf16>, vector<48x32xbf16>, vector<8x32xf32> -> vector<8x32xf32>
    %c0_15 = arith.constant 0 : index
    %c0_16 = arith.constant 0 : index
    %20 = vector.load %arg8[%c0_15, %c0_16] : memref<1x32xf32, #tpu.memory_space<vmem>>, vector<1x32xf32>
    %21 = vector.broadcast %20 : vector<1x32xf32> to vector<8x32xf32>
    %22 = arith.addf %19, %21 : vector<8x32xf32>
    %cst_17 = arith.constant 0.000000e+00 : f32
    %23 = vector.broadcast %cst_17 : f32 to vector<8x32xf32>
    %24 = arith.maximumf %22, %23 : vector<8x32xf32>
    %25 = arith.truncf %24 : vector<8x32xf32> to vector<8x32xbf16>
    %c0_18 = arith.constant 0 : index
    %c0_19 = arith.constant 0 : index
    %26 = vector.load %arg9[%c0_18, %c0_19] : memref<32x16xbf16, #tpu.memory_space<vmem>>, vector<32x16xbf16>
    %cst_20 = arith.constant dense<0.000000e+00> : vector<8x16xf32>
    %27 = tpu.matmul %25, %26, %cst_20 {dimension_numbers = #tpu.dot_dimension_numbers<[1], [0], [0], [1], [0, 0, 1, 1], [], []>} : vector<8x32xbf16>, vector<32x16xbf16>, vector<8x16xf32> -> vector<8x16xf32>
    %c0_21 = arith.constant 0 : index
    %c0_22 = arith.constant 0 : index
    %28 = vector.load %arg10[%c0_21, %c0_22] : memref<1x16xf32, #tpu.memory_space<vmem>>, vector<1x16xf32>
    %29 = vector.broadcast %28 : vector<1x16xf32> to vector<8x16xf32>
    %30 = arith.addf %27, %29 : vector<8x16xf32>
    %cst_23 = arith.constant 0.000000e+00 : f32
    %31 = vector.broadcast %cst_23 : f32 to vector<8x16xf32>
    %32 = arith.maximumf %30, %31 : vector<8x16xf32>
    %33 = arith.truncf %32 : vector<8x16xf32> to vector<8x16xbf16>
    %c0_24 = arith.constant 0 : index
    %c0_25 = arith.constant 0 : index
    %34 = vector.load %arg11[%c0_24, %c0_25] : memref<16x16xbf16, #tpu.memory_space<vmem>>, vector<16x16xbf16>
    %cst_26 = arith.constant dense<0.000000e+00> : vector<8x16xf32>
    %35 = tpu.matmul %33, %34, %cst_26 {dimension_numbers = #tpu.dot_dimension_numbers<[1], [0], [0], [1], [0, 0, 1, 1], [], []>} : vector<8x16xbf16>, vector<16x16xbf16>, vector<8x16xf32> -> vector<8x16xf32>
    %c0_27 = arith.constant 0 : index
    %c0_28 = arith.constant 0 : index
    %36 = vector.load %arg12[%c0_27, %c0_28] : memref<1x16xf32, #tpu.memory_space<vmem>>, vector<1x16xf32>
    %37 = vector.broadcast %36 : vector<1x16xf32> to vector<8x16xf32>
    %38 = arith.addf %35, %37 : vector<8x16xf32>
    %39 = vector.extract_strided_slice %38 {offsets = [0, 0], sizes = [8, 8], strides = [1, 1]} : vector<8x16xf32> to vector<8x8xf32>
    %40 = vector.extract_strided_slice %38 {offsets = [0, 8], sizes = [8, 8], strides = [1, 1]} : vector<8x16xf32> to vector<8x8xf32>
    %c0_29 = arith.constant 0 : index
    %c0_30 = arith.constant 0 : index
    %41 = vector.load %arg2[%c0_29, %c0_30] : memref<8x8xf32, #tpu.memory_space<vmem>>, vector<8x8xf32>
    %cst_31 = arith.constant 5.000000e-01 : f32
    %42 = vector.broadcast %cst_31 : f32 to vector<8x8xf32>
    %43 = arith.mulf %42, %40 : vector<8x8xf32>
    %44 = math.exp %43 : vector<8x8xf32>
    %45 = arith.mulf %41, %44 : vector<8x8xf32>
    %46 = arith.addf %39, %45 : vector<8x8xf32>
    %47 = arith.truncf %46 : vector<8x8xf32> to vector<8x8xbf16>
    %c0_32 = arith.constant 0 : index
    %c0_33 = arith.constant 0 : index
    %48 = vector.load %arg13[%c0_32, %c0_33] : memref<8x16xbf16, #tpu.memory_space<vmem>>, vector<8x16xbf16>
    %cst_34 = arith.constant dense<0.000000e+00> : vector<8x16xf32>
    %49 = tpu.matmul %47, %48, %cst_34 {dimension_numbers = #tpu.dot_dimension_numbers<[1], [0], [0], [1], [0, 0, 1, 1], [], []>} : vector<8x8xbf16>, vector<8x16xbf16>, vector<8x16xf32> -> vector<8x16xf32>
    %c0_35 = arith.constant 0 : index
    %c0_36 = arith.constant 0 : index
    %50 = vector.load %arg14[%c0_35, %c0_36] : memref<1x16xf32, #tpu.memory_space<vmem>>, vector<1x16xf32>
    %51 = vector.broadcast %50 : vector<1x16xf32> to vector<8x16xf32>
    %52 = arith.addf %49, %51 : vector<8x16xf32>
    %cst_37 = arith.constant 0.000000e+00 : f32
    %53 = vector.broadcast %cst_37 : f32 to vector<8x16xf32>
    %54 = arith.maximumf %52, %53 : vector<8x16xf32>
    %55 = arith.truncf %54 : vector<8x16xf32> to vector<8x16xbf16>
    %c0_38 = arith.constant 0 : index
    %c0_39 = arith.constant 0 : index
    %56 = vector.load %arg15[%c0_38, %c0_39] : memref<16x32xbf16, #tpu.memory_space<vmem>>, vector<16x32xbf16>
    %cst_40 = arith.constant dense<0.000000e+00> : vector<8x32xf32>
    %57 = tpu.matmul %55, %56, %cst_40 {dimension_numbers = #tpu.dot_dimension_numbers<[1], [0], [0], [1], [0, 0, 1, 1], [], []>} : vector<8x16xbf16>, vector<16x32xbf16>, vector<8x32xf32> -> vector<8x32xf32>
    %c0_41 = arith.constant 0 : index
    %c0_42 = arith.constant 0 : index
    %58 = vector.load %arg16[%c0_41, %c0_42] : memref<1x32xf32, #tpu.memory_space<vmem>>, vector<1x32xf32>
    %59 = vector.broadcast %58 : vector<1x32xf32> to vector<8x32xf32>
    %60 = arith.addf %57, %59 : vector<8x32xf32>
    %cst_43 = arith.constant 0.000000e+00 : f32
    %61 = vector.broadcast %cst_43 : f32 to vector<8x32xf32>
    %62 = arith.maximumf %60, %61 : vector<8x32xf32>
    %63 = arith.truncf %62 : vector<8x32xf32> to vector<8x32xbf16>
    %c0_44 = arith.constant 0 : index
    %c0_45 = arith.constant 0 : index
    %64 = vector.load %arg17[%c0_44, %c0_45] : memref<32x48xbf16, #tpu.memory_space<vmem>>, vector<32x48xbf16>
    %cst_46 = arith.constant dense<0.000000e+00> : vector<8x48xf32>
    %65 = tpu.matmul %63, %64, %cst_46 {dimension_numbers = #tpu.dot_dimension_numbers<[1], [0], [0], [1], [0, 0, 1, 1], [], []>} : vector<8x32xbf16>, vector<32x48xbf16>, vector<8x48xf32> -> vector<8x48xf32>
    %c0_47 = arith.constant 0 : index
    %c0_48 = arith.constant 0 : index
    %66 = vector.load %arg18[%c0_47, %c0_48] : memref<1x48xf32, #tpu.memory_space<vmem>>, vector<1x48xf32>
    %67 = vector.broadcast %66 : vector<1x48xf32> to vector<8x48xf32>
    %68 = arith.addf %65, %67 : vector<8x48xf32>
    %cst_49 = arith.constant 0.000000e+00 : f32
    %69 = vector.broadcast %cst_49 : f32 to vector<8x48xf32>
    %70 = arith.maximumf %68, %69 : vector<8x48xf32>
    %71 = arith.truncf %70 : vector<8x48xf32> to vector<8x48xbf16>
    %c0_50 = arith.constant 0 : index
    %c0_51 = arith.constant 0 : index
    %72 = vector.load %arg19[%c0_50, %c0_51] : memref<48x64xbf16, #tpu.memory_space<vmem>>, vector<48x64xbf16>
    %cst_52 = arith.constant dense<0.000000e+00> : vector<8x64xf32>
    %73 = tpu.matmul %71, %72, %cst_52 {dimension_numbers = #tpu.dot_dimension_numbers<[1], [0], [0], [1], [0, 0, 1, 1], [], []>} : vector<8x48xbf16>, vector<48x64xbf16>, vector<8x64xf32> -> vector<8x64xf32>
    %c0_53 = arith.constant 0 : index
    %c0_54 = arith.constant 0 : index
    %74 = vector.load %arg20[%c0_53, %c0_54] : memref<1x64xf32, #tpu.memory_space<vmem>>, vector<1x64xf32>
    %75 = vector.broadcast %74 : vector<1x64xf32> to vector<8x64xf32>
    %76 = arith.addf %73, %75 : vector<8x64xf32>
    %cst_55 = arith.constant 0.000000e+00 : f32
    %77 = vector.broadcast %cst_55 : f32 to vector<8x64xf32>
    %78 = arith.maximumf %76, %77 : vector<8x64xf32>
    %79 = arith.truncf %78 : vector<8x64xf32> to vector<8x64xbf16>
    %c0_56 = arith.constant 0 : index
    %c0_57 = arith.constant 0 : index
    %80 = vector.load %arg21[%c0_56, %c0_57] : memref<64x128xbf16, #tpu.memory_space<vmem>>, vector<64x128xbf16>
    %cst_58 = arith.constant dense<0.000000e+00> : vector<8x128xf32>
    %81 = tpu.matmul %79, %80, %cst_58 {dimension_numbers = #tpu.dot_dimension_numbers<[1], [0], [0], [1], [0, 0, 1, 1], [], []>} : vector<8x64xbf16>, vector<64x128xbf16>, vector<8x128xf32> -> vector<8x128xf32>
    %c0_59 = arith.constant 0 : index
    %c0_60 = arith.constant 0 : index
    %82 = vector.load %arg22[%c0_59, %c0_60] : memref<1x128xf32, #tpu.memory_space<vmem>>, vector<1x128xf32>
    %83 = vector.broadcast %82 : vector<1x128xf32> to vector<8x128xf32>
    %84 = arith.addf %81, %83 : vector<8x128xf32>
    %c0_61 = arith.constant 0 : index
    %c0_62 = arith.constant 0 : index
    %85 = vector.load %arg23[%c0_61, %c0_62] : memref<8x128xf32, #tpu.memory_space<vmem>>, vector<8x128xf32>
    tpu.vector_store %arg23[%c0_61, %c0_62], %84 {strides = array<i32>} : memref<8x128xf32, #tpu.memory_space<vmem>>, vector<8x128xf32>,
    %cst_63 = arith.constant 0.000000e+00 : f32
    %86 = vector.broadcast %cst_63 : f32 to vector<8x104xf32>
    %87 = tpu.concatenate %39, %40, %46, %86 in 1 : vector<8x8xf32>, vector<8x8xf32>, vector<8x8xf32>, vector<8x104xf32> -> vector<8x128xf32>
    %c0_64 = arith.constant 0 : index
    %c0_65 = arith.constant 0 : index
    %88 = vector.load %arg24[%c0_64, %c0_65] : memref<8x128xf32, #tpu.memory_space<vmem>>, vector<8x128xf32>
    tpu.vector_store %arg24[%c0_64, %c0_65], %87 {strides = array<i32>} : memref<8x128xf32, #tpu.memory_space<vmem>>, vector<8x128xf32>,
    return
  }
  func.func @transform_0(%arg0: i32) -> (i32, i32) {
    %c0_i32 = arith.constant 0 : i32
    %c0_i32_0 = arith.constant 0 : i32
    return %arg0, %c0_i32 : i32, i32
  }
  func.func @transform_1(%arg0: i32) -> (i32, i32) {
    %c0_i32 = arith.constant 0 : i32
    %c0_i32_0 = arith.constant 0 : i32
    return %arg0, %c0_i32 : i32, i32
  }
  func.func @transform_2(%arg0: i32) -> (i32, i32) {
    %c0_i32 = arith.constant 0 : i32
    %c0_i32_0 = arith.constant 0 : i32
    %c0_i32_1 = arith.constant 0 : i32
    return %c0_i32, %c0_i32_0 : i32, i32
  }
  func.func @transform_3(%arg0: i32) -> (i32, i32) {
    %c0_i32 = arith.constant 0 : i32
    %c0_i32_0 = arith.constant 0 : i32
    %c0_i32_1 = arith.constant 0 : i32
    return %c0_i32, %c0_i32_0 : i32, i32
  }
  func.func @transform_4(%arg0: i32) -> (i32, i32) {
    %c0_i32 = arith.constant 0 : i32
    %c0_i32_0 = arith.constant 0 : i32
    %c0_i32_1 = arith.constant 0 : i32
    return %c0_i32, %c0_i32_0 : i32, i32
  }
  func.func @transform_5(%arg0: i32) -> (i32, i32) {
    %c0_i32 = arith.constant 0 : i32
    %c0_i32_0 = arith.constant 0 : i32
    %c0_i32_1 = arith.constant 0 : i32
    return %c0_i32, %c0_i32_0 : i32, i32
  }
  func.func @transform_6(%arg0: i32) -> (i32, i32) {
    %c0_i32 = arith.constant 0 : i32
    %c0_i32_0 = arith.constant 0 : i32
    %c0_i32_1 = arith.constant 0 : i32
    return %c0_i32, %c0_i32_0 : i32, i32
  }
  func.func @transform_7(%arg0: i32) -> (i32, i32) {
    %c0_i32 = arith.constant 0 : i32
    %c0_i32_0 = arith.constant 0 : i32
    %c0_i32_1 = arith.constant 0 : i32
    return %c0_i32, %c0_i32_0 : i32, i32
  }
  func.func @transform_8(%arg0: i32) -> (i32, i32) {
    %c0_i32 = arith.constant 0 : i32
    %c0_i32_0 = arith.constant 0 : i32
    %c0_i32_1 = arith.constant 0 : i32
    return %c0_i32, %c0_i32_0 : i32, i32
  }
  func.func @transform_9(%arg0: i32) -> (i32, i32) {
    %c0_i32 = arith.constant 0 : i32
    %c0_i32_0 = arith.constant 0 : i32
    %c0_i32_1 = arith.constant 0 : i32
    return %c0_i32, %c0_i32_0 : i32, i32
  }
  func.func @transform_10(%arg0: i32) -> (i32, i32) {
    %c0_i32 = arith.constant 0 : i32
    %c0_i32_0 = arith.constant 0 : i32
    %c0_i32_1 = arith.constant 0 : i32
    return %c0_i32, %c0_i32_0 : i32, i32
  }
  func.func @transform_11(%arg0: i32) -> (i32, i32) {
    %c0_i32 = arith.constant 0 : i32
    %c0_i32_0 = arith.constant 0 : i32
    %c0_i32_1 = arith.constant 0 : i32
    return %c0_i32, %c0_i32_0 : i32, i32
  }
  func.func @transform_12(%arg0: i32) -> (i32, i32) {
    %c0_i32 = arith.constant 0 : i32
    %c0_i32_0 = arith.constant 0 : i32
    %c0_i32_1 = arith.constant 0 : i32
    return %c0_i32, %c0_i32_0 : i32, i32
  }
  func.func @transform_13(%arg0: i32) -> (i32, i32) {
    %c0_i32 = arith.constant 0 : i32
    %c0_i32_0 = arith.constant 0 : i32
    %c0_i32_1 = arith.constant 0 : i32
    return %c0_i32, %c0_i32_0 : i32, i32
  }
  func.func @transform_14(%arg0: i32) -> (i32, i32) {
    %c0_i32 = arith.constant 0 : i32
    %c0_i32_0 = arith.constant 0 : i32
    %c0_i32_1 = arith.constant 0 : i32
    return %c0_i32, %c0_i32_0 : i32, i32
  }
  func.func @transform_15(%arg0: i32) -> (i32, i32) {
    %c0_i32 = arith.constant 0 : i32
    %c0_i32_0 = arith.constant 0 : i32
    %c0_i32_1 = arith.constant 0 : i32
    return %c0_i32, %c0_i32_0 : i32, i32
  }
  func.func @transform_16(%arg0: i32) -> (i32, i32) {
    %c0_i32 = arith.constant 0 : i32
    %c0_i32_0 = arith.constant 0 : i32
    %c0_i32_1 = arith.constant 0 : i32
    return %c0_i32, %c0_i32_0 : i32, i32
  }
  func.func @transform_17(%arg0: i32) -> (i32, i32) {
    %c0_i32 = arith.constant 0 : i32
    %c0_i32_0 = arith.constant 0 : i32
    %c0_i32_1 = arith.constant 0 : i32
    return %c0_i32, %c0_i32_0 : i32, i32
  }
  func.func @transform_18(%arg0: i32) -> (i32, i32) {
    %c0_i32 = arith.constant 0 : i32
    %c0_i32_0 = arith.constant 0 : i32
    %c0_i32_1 = arith.constant 0 : i32
    return %c0_i32, %c0_i32_0 : i32, i32
  }
  func.func @transform_19(%arg0: i32) -> (i32, i32) {
    %c0_i32 = arith.constant 0 : i32
    %c0_i32_0 = arith.constant 0 : i32
    %c0_i32_1 = arith.constant 0 : i32
    return %c0_i32, %c0_i32_0 : i32, i32
  }
  func.func @transform_20(%arg0: i32) -> (i32, i32) {
    %c0_i32 = arith.constant 0 : i32
    %c0_i32_0 = arith.constant 0 : i32
    %c0_i32_1 = arith.constant 0 : i32
    return %c0_i32, %c0_i32_0 : i32, i32
  }
  func.func @transform_21(%arg0: i32) -> (i32, i32) {
    %c0_i32 = arith.constant 0 : i32
    %c0_i32_0 = arith.constant 0 : i32
    %c0_i32_1 = arith.constant 0 : i32
    return %c0_i32, %c0_i32_0 : i32, i32
  }
  func.func @transform_22(%arg0: i32) -> (i32, i32) {
    %c0_i32 = arith.constant 0 : i32
    %c0_i32_0 = arith.constant 0 : i32
    return %arg0, %c0_i32 : i32, i32
  }
  func.func @transform_23(%arg0: i32) -> (i32, i32) {
    %c0_i32 = arith.constant 0 : i32
    %c0_i32_0 = arith.constant 0 : i32
    return %arg0, %c0_i32 : i32, i32
  }
}

</mosaic_0001>

<llo_original>
// kernel: tpu_custom_call.1
$region0: #{tpu_custom_call.1}
  #allocation0 [shape = 'u32[]', space=smem, size = 0x4, offset = 0x4, fixed_abs, tag = 'smem constant byte address 0x4 - core index']
  #allocation1 [shape = 'u32[144,128]{1,0:T(1,128)}', space=vmem, size = 0x12000, scoped, tag = 'internal scratch']
  %s0 = inlined_call_operand.hbm [shape: f32[8,50], index: 0, kind: input, shape index: {}]
  %s1 = inlined_call_operand.hbm [shape: f32[8,8], index: 1, kind: input, shape index: {}]
  %s2 = inlined_call_operand.vmem [shape: bf16[50,64], index: 2, kind: input, shape index: {}]
  %s3 = inlined_call_operand.vmem [shape: f32[1,64], index: 3, kind: input, shape index: {}]
  %s4 = inlined_call_operand.vmem [shape: bf16[64,48], index: 4, kind: input, shape index: {}]
  %s5 = inlined_call_operand.hbm [shape: f32[1,48], index: 5, kind: input, shape index: {}]
  %s6 = inlined_call_operand.vmem [shape: bf16[48,32], index: 6, kind: input, shape index: {}]
  %s7 = inlined_call_operand.hbm [shape: f32[1,32], index: 7, kind: input, shape index: {}]
  %s8 = inlined_call_operand.vmem [shape: bf16[32,16], index: 8, kind: input, shape index: {}]
  %s9 = inlined_call_operand.hbm [shape: f32[1,16], index: 9, kind: input, shape index: {}]
  %s10 = inlined_call_operand.vmem [shape: bf16[16,16], index: 10, kind: input, shape index: {}]
  %s11 = inlined_call_operand.hbm [shape: f32[1,16], index: 11, kind: input, shape index: {}]
  %s12 = inlined_call_operand.vmem [shape: bf16[8,16], index: 12, kind: input, shape index: {}]
  %s13 = inlined_call_operand.vmem [shape: f32[1,16], index: 13, kind: input, shape index: {}]
  %s14 = inlined_call_operand.vmem [shape: bf16[16,32], index: 14, kind: input, shape index: {}]
  %s15 = inlined_call_operand.vmem [shape: f32[1,32], index: 15, kind: input, shape index: {}]
  %s16 = inlined_call_operand.vmem [shape: bf16[32,48], index: 16, kind: input, shape index: {}]
  %s17 = inlined_call_operand.vmem [shape: f32[1,48], index: 17, kind: input, shape index: {}]
  %s18 = inlined_call_operand.vmem [shape: bf16[48,64], index: 18, kind: input, shape index: {}]
  %s19 = inlined_call_operand.vmem [shape: f32[1,64], index: 19, kind: input, shape index: {}]
  %s20 = inlined_call_operand.vmem [shape: bf16[64,128], index: 20, kind: input, shape index: {}]
  %s21 = inlined_call_operand.vmem [shape: f32[1,128], index: 21, kind: input, shape index: {}]
  %s22 = inlined_call_operand.hbm [shape: f32[8,128], index: 22, kind: output, shape index: {0}]
  %s23 = inlined_call_operand.hbm [shape: f32[8,128], index: 23, kind: output, shape index: {1}]
  %24 = xla_tuple %s22, %s23
  %s25 = sld [smem:[#allocation0]]
  $region130: #{tpu_custom_call.1} parent=0
    _
  %s27 = ssub.s32 1, %s25
  %s28 = scalar_select 0, %s27, %s25
  $region1: #{tpu_custom_call.1} parent=0
    #allocation2 [shape = 'u8[4096]{0}', space=vmem, size = 0x1000, scoped, tag = 'input window, operand 0, single buffered']
    #allocation3 [shape = 's32[1]{0}', space=sflag, size = 0x4, scoped, tag = 'scoped memory for tpu_custom_call.1']
    #allocation4 [shape = 's32[1]{0}', space=sflag, size = 0x4, scoped, tag = 'scoped memory for tpu_custom_call.1']
    #allocation5 [shape = 'u8[4096]{0}', space=vmem, size = 0x1000, scoped, tag = 'input window, operand 1, single buffered']
    #allocation6 [shape = 's32[1]{0}', space=sflag, size = 0x4, scoped, tag = 'scoped memory for tpu_custom_call.1']
    #allocation7 [shape = 'u8[512]{0}', space=vmem, size = 0x400, scoped, tag = 'input window, operand 5, single buffered']
    #allocation8 [shape = 'u8[512]{0}', space=vmem, size = 0x400, scoped, tag = 'input window, operand 7, single buffered']
    #allocation9 [shape = 's32[1]{0}', space=sflag, size = 0x4, scoped, tag = 'scoped memory for tpu_custom_call.1']
    #allocation10 [shape = 'u8[512]{0}', space=vmem, size = 0x400, scoped, tag = 'input window, operand 9, single buffered']
    #allocation11 [shape = 'u8[512]{0}', space=vmem, size = 0x400, scoped, tag = 'input window, operand 11, single buffered']
    #allocation12 [shape = 's32[1]{0}', space=sflag, size = 0x4, scoped, tag = 'scoped memory for tpu_custom_call.1']
    #allocation13 [shape = 'u8[4096]{0}', space=vmem, size = 0x1000, scoped, tag = 'output window, operand 0, single buffered']
    #allocation14 [shape = 'u8[4096]{0}', space=vmem, size = 0x1000, scoped, tag = 'output window, operand 1, single buffered']
    #allocation15 [shape = 's32[1]{0}', space=sflag, size = 0x4, scoped, tag = 'scoped memory for tpu_custom_call.1']
    %29 = vsyncpa [#allocation3], 0
    %30 = vsyncpa [#allocation6], 0
    %31 = vsyncpa [#allocation9], 0
    %32 = vsyncpa [#allocation12], 0
    %33 = vsyncpa [#allocation4], 0
    %34 = vsyncpa [#allocation15], 0
    // Predicated region
    $region2: #{tpu_custom_call.1} parent=1 // pred_check
      _
    $region3: #{tpu_custom_call.1} parent=1 // pred_check_branch
      %36 = sbr.rel (0) target = $region5
    $region4: #{tpu_custom_call.1} parent=1 // pred_region
      %s38 = ssub.s32 128, 128
      %39 = vsyncadd [#allocation3], %s38
      %s41 = sshll.u32 [#allocation2], 4
      %s42 = int_to_ptr.vmem [resolvable:$true] %s41
      %44 = dma.hbm_to_vmem [thread:$0]  %s0, 128, %s42, [#allocation3]
    $region5: #{tpu_custom_call.1} parent=1 // pred_fallthru
      _
    // Predicated region
    $region6: #{tpu_custom_call.1} parent=1 // pred_check
      _
    $region7: #{tpu_custom_call.1} parent=1 // pred_check_branch
      %46 = sbr.rel (0) target = $region9
    $region8: #{tpu_custom_call.1} parent=1 // pred_region
      %s48 = ssub.s32 128, 128
      %49 = vsyncadd [#allocation6], %s48
      %s51 = sshll.u32 [#allocation5], 4
      %s52 = int_to_ptr.vmem [resolvable:$true] %s51
      %54 = dma.hbm_to_vmem [thread:$0]  %s1, 128, %s52, [#allocation6]
    $region9: #{tpu_custom_call.1} parent=1 // pred_fallthru
      _
    // Predicated region
    $region10: #{tpu_custom_call.1} parent=1 // pred_check
      _
    $region11: #{tpu_custom_call.1} parent=1 // pred_check_branch
      %56 = sbr.rel (0) target = $region13
    $region12: #{tpu_custom_call.1} parent=1 // pred_region
      _
    $region13: #{tpu_custom_call.1} parent=1 // pred_fallthru
      _
    // Predicated region
    $region14: #{tpu_custom_call.1} parent=1 // pred_check
      _
    $region15: #{tpu_custom_call.1} parent=1 // pred_check_branch
      %58 = sbr.rel (0) target = $region17
    $region16: #{tpu_custom_call.1} parent=1 // pred_region
      _
    $region17: #{tpu_custom_call.1} parent=1 // pred_fallthru
      _
    // Predicated region
    $region18: #{tpu_custom_call.1} parent=1 // pred_check
      _
    $region19: #{tpu_custom_call.1} parent=1 // pred_check_branch
      %60 = sbr.rel (0) target = $region21
    $region20: #{tpu_custom_call.1} parent=1 // pred_region
      _
    $region21: #{tpu_custom_call.1} parent=1 // pred_fallthru
      _
    // Predicated region
    $region22: #{tpu_custom_call.1} parent=1 // pred_check
      _
    $region23: #{tpu_custom_call.1} parent=1 // pred_check_branch
      %62 = sbr.rel (0) target = $region25
    $region24: #{tpu_custom_call.1} parent=1 // pred_region
      %s64 = ssub.s32 16, 16
      %65 = vsyncadd [#allocation6], %s64
      %s67 = sshll.u32 [#allocation7], 4
      %s68 = int_to_ptr.vmem [resolvable:$true] %s67
      %70 = dma.hbm_to_vmem [thread:$0]  %s5, 16, %s68, [#allocation6]
    $region25: #{tpu_custom_call.1} parent=1 // pred_fallthru
      _
    // Predicated region
    $region26: #{tpu_custom_call.1} parent=1 // pred_check
      _
    $region27: #{tpu_custom_call.1} parent=1 // pred_check_branch
      %72 = sbr.rel (0) target = $region29
    $region28: #{tpu_custom_call.1} parent=1 // pred_region
      _
    $region29: #{tpu_custom_call.1} parent=1 // pred_fallthru
      _
    // Predicated region
    $region30: #{tpu_custom_call.1} parent=1 // pred_check
      _
    $region31: #{tpu_custom_call.1} parent=1 // pred_check_branch
      %74 = sbr.rel (0) target = $region33
    $region32: #{tpu_custom_call.1} parent=1 // pred_region
      %s76 = ssub.s32 16, 16
      %77 = vsyncadd [#allocation9], %s76
      %s79 = sshll.u32 [#allocation8], 4
      %s80 = int_to_ptr.vmem [resolvable:$true] %s79
      %82 = dma.hbm_to_vmem [thread:$0]  %s7, 16, %s80, [#allocation9]
    $region33: #{tpu_custom_call.1} parent=1 // pred_fallthru
      _
    // Predicated region
    $region34: #{tpu_custom_call.1} parent=1 // pred_check
      _
    $region35: #{tpu_custom_call.1} parent=1 // pred_check_branch
      %84 = sbr.rel (0) target = $region37
    $region36: #{tpu_custom_call.1} parent=1 // pred_region
      _
    $region37: #{tpu_custom_call.1} parent=1 // pred_fallthru
      _
    // Predicated region
    $region38: #{tpu_custom_call.1} parent=1 // pred_check
      _
    $region39: #{tpu_custom_call.1} parent=1 // pred_check_branch
      %86 = sbr.rel (0) target = $region41
    $region40: #{tpu_custom_call.1} parent=1 // pred_region
      %s88 = ssub.s32 16, 16
      %89 = vsyncadd [#allocation9], %s88
      %s91 = sshll.u32 [#allocation10], 4
      %s92 = int_to_ptr.vmem [resolvable:$true] %s91
      %94 = dma.hbm_to_vmem [thread:$0]  %s9, 16, %s92, [#allocation9]
    $region41: #{tpu_custom_call.1} parent=1 // pred_fallthru
      _
    // Predicated region
    $region42: #{tpu_custom_call.1} parent=1 // pred_check
      _
    $region43: #{tpu_custom_call.1} parent=1 // pred_check_branch
      %96 = sbr.rel (0) target = $region45
    $region44: #{tpu_custom_call.1} parent=1 // pred_region
      _
    $region45: #{tpu_custom_call.1} parent=1 // pred_fallthru
      _
    // Predicated region
    $region46: #{tpu_custom_call.1} parent=1 // pred_check
      _
    $region47: #{tpu_custom_call.1} parent=1 // pred_check_branch
      %98 = sbr.rel (0) target = $region49
    $region48: #{tpu_custom_call.1} parent=1 // pred_region
      %s100 = ssub.s32 16, 16
      %101 = vsyncadd [#allocation12], %s100
      %s103 = sshll.u32 [#allocation11], 4
      %s104 = int_to_ptr.vmem [resolvable:$true] %s103
      %106 = dma.hbm_to_vmem [thread:$0]  %s11, 16, %s104, [#allocation12]
    $region49: #{tpu_custom_call.1} parent=1 // pred_fallthru
      _
    // Predicated region
    $region50: #{tpu_custom_call.1} parent=1 // pred_check
      _
    $region51: #{tpu_custom_call.1} parent=1 // pred_check_branch
      %108 = sbr.rel (0) target = $region53
    $region52: #{tpu_custom_call.1} parent=1 // pred_region
      _
    $region53: #{tpu_custom_call.1} parent=1 // pred_fallthru
      _
    // Predicated region
    $region54: #{tpu_custom_call.1} parent=1 // pred_check
      _
    $region55: #{tpu_custom_call.1} parent=1 // pred_check_branch
      %110 = sbr.rel (0) target = $region57
    $region56: #{tpu_custom_call.1} parent=1 // pred_region
      _
    $region57: #{tpu_custom_call.1} parent=1 // pred_fallthru
      _
    // Predicated region
    $region58: #{tpu_custom_call.1} parent=1 // pred_check
      _
    $region59: #{tpu_custom_call.1} parent=1 // pred_check_branch
      %112 = sbr.rel (0) target = $region61
    $region60: #{tpu_custom_call.1} parent=1 // pred_region
      _
    $region61: #{tpu_custom_call.1} parent=1 // pred_fallthru
      _
    // Predicated region
    $region62: #{tpu_custom_call.1} parent=1 // pred_check
      _
    $region63: #{tpu_custom_call.1} parent=1 // pred_check_branch
      %114 = sbr.rel (0) target = $region65
    $region64: #{tpu_custom_call.1} parent=1 // pred_region
      _
    $region65: #{tpu_custom_call.1} parent=1 // pred_fallthru
      _
    // Predicated region
    $region66: #{tpu_custom_call.1} parent=1 // pred_check
      _
    $region67: #{tpu_custom_call.1} parent=1 // pred_check_branch
      %116 = sbr.rel (0) target = $region69
    $region68: #{tpu_custom_call.1} parent=1 // pred_region
      _
    $region69: #{tpu_custom_call.1} parent=1 // pred_fallthru
      _
    // Predicated region
    $region70: #{tpu_custom_call.1} parent=1 // pred_check
      _
    $region71: #{tpu_custom_call.1} parent=1 // pred_check_branch
      %118 = sbr.rel (0) target = $region73
    $region72: #{tpu_custom_call.1} parent=1 // pred_region
      _
    $region73: #{tpu_custom_call.1} parent=1 // pred_fallthru
      _
    // Predicated region
    $region74: #{tpu_custom_call.1} parent=1 // pred_check
      _
    $region75: #{tpu_custom_call.1} parent=1 // pred_check_branch
      %120 = sbr.rel (0) target = $region77
    $region76: #{tpu_custom_call.1} parent=1 // pred_region
      _
    $region77: #{tpu_custom_call.1} parent=1 // pred_fallthru
      _
    // Predicated region
    $region78: #{tpu_custom_call.1} parent=1 // pred_check
      _
    $region79: #{tpu_custom_call.1} parent=1 // pred_check_branch
      %122 = sbr.rel (0) target = $region81
    $region80: #{tpu_custom_call.1} parent=1 // pred_region
      _
    $region81: #{tpu_custom_call.1} parent=1 // pred_fallthru
      _
    // Predicated region
    $region82: #{tpu_custom_call.1} parent=1 // pred_check
      _
    $region83: #{tpu_custom_call.1} parent=1 // pred_check_branch
      %124 = sbr.rel (0) target = $region85
    $region84: #{tpu_custom_call.1} parent=1 // pred_region
      _
    $region85: #{tpu_custom_call.1} parent=1 // pred_fallthru
      _
    // Predicated region
    $region86: #{tpu_custom_call.1} parent=1 // pred_check
      _
    $region87: #{tpu_custom_call.1} parent=1 // pred_check_branch
      %126 = sbr.rel (0) target = $region89
    $region88: #{tpu_custom_call.1} parent=1 // pred_region
      _
    $region89: #{tpu_custom_call.1} parent=1 // pred_fallthru
      _
    // Predicated region
    $region90: #{tpu_custom_call.1} parent=1 // pred_check
      _
    $region91: #{tpu_custom_call.1} parent=1 // pred_check_branch
      %128 = sbr.rel (0) target = $region93
    $region92: #{tpu_custom_call.1} parent=1 // pred_region
      %129 = dma.done [#allocation3], 128
    $region93: #{tpu_custom_call.1} parent=1 // pred_fallthru
      _
    // Predicated region
    $region94: #{tpu_custom_call.1} parent=1 // pred_check
      _
    $region95: #{tpu_custom_call.1} parent=1 // pred_check_branch
      %131 = sbr.rel (0) target = $region97
    $region96: #{tpu_custom_call.1} parent=1 // pred_region
      %132 = dma.done [#allocation6], 128
    $region97: #{tpu_custom_call.1} parent=1 // pred_fallthru
      _
    // Predicated region
    $region98: #{tpu_custom_call.1} parent=1 // pred_check
      _
    $region99: #{tpu_custom_call.1} parent=1 // pred_check_branch
      %134 = sbr.rel (0) target = $region101
    $region100: #{tpu_custom_call.1} parent=1 // pred_region
      %135 = dma.done [#allocation6], 16
    $region101: #{tpu_custom_call.1} parent=1 // pred_fallthru
      _
    // Predicated region
    $region102: #{tpu_custom_call.1} parent=1 // pred_check
      _
    $region103: #{tpu_custom_call.1} parent=1 // pred_check_branch
      %137 = sbr.rel (0) target = $region105
    $region104: #{tpu_custom_call.1} parent=1 // pred_region
      %138 = dma.done [#allocation9], 16
    $region105: #{tpu_custom_call.1} parent=1 // pred_fallthru
      _
    // Predicated region
    $region106: #{tpu_custom_call.1} parent=1 // pred_check
      _
    $region107: #{tpu_custom_call.1} parent=1 // pred_check_branch
      %140 = sbr.rel (0) target = $region109
    $region108: #{tpu_custom_call.1} parent=1 // pred_region
      %141 = dma.done [#allocation9], 16
    $region109: #{tpu_custom_call.1} parent=1 // pred_fallthru
      _
    // Predicated region
    $region110: #{tpu_custom_call.1} parent=1 // pred_check
      _
    $region111: #{tpu_custom_call.1} parent=1 // pred_check_branch
      %143 = sbr.rel (0) target = $region113
    $region112: #{tpu_custom_call.1} parent=1 // pred_region
      %144 = dma.done [#allocation12], 16
    $region113: #{tpu_custom_call.1} parent=1 // pred_fallthru
      _
    %v146 = vld [vmem:[#allocation2] sm:$0xff]
    %v147 = vpack.c.bf16 %v146, %v146
    %v148 = vld [vmem:[%s2] sm:$0xf]
    %v149 = vld [vmem:[%s2 + $0x4] sm:$0xf]
    %v150 = vld [vmem:[%s2 + $0x8] sm:$0xf]
    %v151 = vld [vmem:[%s2 + $0xc] sm:$0xf]
    %v152 = vld [vmem:[%s2 + $0x10] sm:$0xf]
    %v153 = vld [vmem:[%s2 + $0x14] sm:$0xf]
    %v154 = vld [vmem:[%s2 + $0x18] sm:$0x1]
    %v155 = vld [vmem:[%s3] sm:$0x1]
    %v157 = vlaneseq
    %v158 = vshrl.u32 %v157, 7
    %v159 = vsub.s32 0, %v158
    %v160 = vrot.slane %v155, %v159
    %v169 = vunpack.c.l.b16 %v148
    %v170 = vunpack.c.l.b16 %v149
    %v171 = vunpack.c.l.b16 %v150
    %v172 = vunpack.c.l.b16 %v151
    %v173 = vunpack.c.l.b16 %v152
    %v174 = vunpack.c.l.b16 %v153
    %v175 = vunpack.c.l.b16 %v154
    %v176 = vpack.c.b16 %v170, %v169
    %v177 = vpack.c.b16 %v172, %v171
    %v178 = vpack.c.b16 %v174, %v173
    %v179 = vpack.c.b16 %v175, %v175
    %vm183 = vcmask 408576
    %v185 = vsel %vm183, %v147, 0
    %vm187 = vcmask 1040384
    %v189 = vsel %vm187, %v179, 0
    %191 = vmatprep.subr.bf16.mxu0 0
    %192 = vmatpush1.bf16.msra.mxu0 %v176
    %193 = vmatprep.subr.bf16.mxu0 0
    %194 = vmatpush1.bf16.msra.mxu0 %v177
    %195 = vmatprep.subr.bf16.mxu0 0
    %196 = vmatpush1.bf16.msra.mxu0 %v178
    %197 = vmatprep.subr.bf16.mxu0 0
    %198 = vmatpush1.bf16.msra.mxu0 %v189
    %199 = vmatprep.subr.bf16.mxu0 0
    %200 = vmatpush1.bf16.msra.mxu0 0
    %201 = vmatprep.subr.bf16.mxu0 0
    %202 = vmatpush1.bf16.msra.mxu0 0
    %203 = vmatprep.subr.bf16.mxu0 0
    %204 = vmatpush1.bf16.msra.mxu0 0
    %205 = vmatprep.subr.bf16.mxu0 0
    %206 = vmatpush1.bf16.msra.mxu0 0
    %207 = vmatprep.subr.bf16.mxu0 0
    %208 = vmatpush1.bf16.msra.mxu0 0
    %209 = vmatprep.subr.bf16.mxu0 0
    %210 = vmatpush1.bf16.msra.mxu0 0
    %211 = vmatprep.subr.bf16.mxu0 0
    %212 = vmatpush1.bf16.msra.mxu0 0
    %213 = vmatprep.subr.bf16.mxu0 0
    %214 = vmatpush1.bf16.msra.mxu0 0
    %215 = vmatprep.subr.bf16.mxu0 0
    %216 = vmatpush1.bf16.msra.mxu0 0
    %217 = vmatprep.subr.bf16.mxu0 0
    %218 = vmatpush1.bf16.msra.mxu0 0
    %219 = vmatprep.subr.bf16.mxu0 0
    %220 = vmatpush1.bf16.msra.mxu0 0
    %221 = vmatprep.subr.bf16.mxu0 0
    %222 = vmatpush1.bf16.msra.mxu0 0
    %223 = vmatprep.mubr.bf16.mxu0 0
    %224 = vmatmul.mubr.bf16.gmra.mrb[0].mxu0 %v185
    %v225 = vpop.f32.mrb[0].mxu0
    %v226 = vadd.f32 %v160, %v225
    %v227 = vpop.f32.mrb[0].mxu0
    %v228 = vpop.f32.mrb[0].mxu0
    %v229 = vpop.f32.mrb[0].mxu0
    %230 = vdwg.mxu0
    %v231 = vmax.f32 %v226, 0.0
    %v232 = vpack.c.bf16 %v231, %v231
    %v233 = vld [vmem:[%s4] sm:$0xf]
    %v234 = vld [vmem:[%s4 + $0x4] sm:$0xf]
    %v235 = vld [vmem:[%s4 + $0x8] sm:$0xf]
    %v236 = vld [vmem:[%s4 + $0xc] sm:$0xf]
    %v237 = vld [vmem:[%s4 + $0x10] sm:$0xf]
    %v238 = vld [vmem:[%s4 + $0x14] sm:$0xf]
    %v239 = vld [vmem:[%s4 + $0x18] sm:$0xf]
    %v240 = vld [vmem:[%s4 + $0x1c] sm:$0xf]
    %v241 = vld [vmem:[#allocation7] sm:$0x1]
    %v243 = vlaneseq
    %v244 = vshrl.u32 %v243, 7
    %v245 = vsub.s32 0, %v244
    %v246 = vrot.slane %v241, %v245
    %v256 = vunpack.c.l.b16 %v233
    %v257 = vunpack.c.l.b16 %v234
    %v258 = vunpack.c.l.b16 %v235
    %v259 = vunpack.c.l.b16 %v236
    %v260 = vunpack.c.l.b16 %v237
    %v261 = vunpack.c.l.b16 %v238
    %v262 = vunpack.c.l.b16 %v239
    %v263 = vunpack.c.l.b16 %v240
    %v264 = vpack.c.b16 %v257, %v256
    %v265 = vpack.c.b16 %v259, %v258
    %v266 = vpack.c.b16 %v261, %v260
    %v267 = vpack.c.b16 %v263, %v262
    %vm272 = vcmask 523264
    %v274 = vsel %vm272, %v232, 0
    %276 = vmatprep.subr.bf16.mxu0 0
    %277 = vmatpush1.bf16.msra.mxu0 %v264
    %278 = vmatprep.subr.bf16.mxu0 0
    %279 = vmatpush1.bf16.msra.mxu0 %v265
    %280 = vmatprep.subr.bf16.mxu0 0
    %281 = vmatpush1.bf16.msra.mxu0 %v266
    %282 = vmatprep.subr.bf16.mxu0 0
    %283 = vmatpush1.bf16.msra.mxu0 %v267
    %284 = vmatprep.subr.bf16.mxu0 0
    %285 = vmatpush1.bf16.msra.mxu0 0
    %286 = vmatprep.subr.bf16.mxu0 0
    %287 = vmatpush1.bf16.msra.mxu0 0
    %288 = vmatprep.subr.bf16.mxu0 0
    %289 = vmatpush1.bf16.msra.mxu0 0
    %290 = vmatprep.subr.bf16.mxu0 0
    %291 = vmatpush1.bf16.msra.mxu0 0
    %292 = vmatprep.subr.bf16.mxu0 0
    %293 = vmatpush1.bf16.msra.mxu0 0
    %294 = vmatprep.subr.bf16.mxu0 0
    %295 = vmatpush1.bf16.msra.mxu0 0
    %296 = vmatprep.subr.bf16.mxu0 0
    %297 = vmatpush1.bf16.msra.mxu0 0
    %298 = vmatprep.subr.bf16.mxu0 0
    %299 = vmatpush1.bf16.msra.mxu0 0
    %300 = vmatprep.subr.bf16.mxu0 0
    %301 = vmatpush1.bf16.msra.mxu0 0
    %302 = vmatprep.subr.bf16.mxu0 0
    %303 = vmatpush1.bf16.msra.mxu0 0
    %304 = vmatprep.subr.bf16.mxu0 0
    %305 = vmatpush1.bf16.msra.mxu0 0
    %306 = vmatprep.subr.bf16.mxu0 0
    %307 = vmatpush1.bf16.msra.mxu0 0
    %308 = vmatprep.mubr.bf16.mxu0 0
    %309 = vmatmul.mubr.bf16.gmra.mrb[0].mxu0 %v274
    %v310 = vpop.f32.mrb[0].mxu0
    %v311 = vadd.f32 %v246, %v310
    %v312 = vpop.f32.mrb[0].mxu0
    %v313 = vpop.f32.mrb[0].mxu0
    %v314 = vpop.f32.mrb[0].mxu0
    %315 = vdwg.mxu0
    %v316 = vmax.f32 %v311, 0.0
    %v317 = vpack.c.bf16 %v316, %v316
    %v318 = vld [vmem:[%s6] sm:$0xf]
    %v319 = vld [vmem:[%s6 + $0x4] sm:$0xf]
    %v320 = vld [vmem:[%s6 + $0x8] sm:$0xf]
    %v321 = vld [vmem:[%s6 + $0xc] sm:$0xf]
    %v322 = vld [vmem:[%s6 + $0x10] sm:$0xf]
    %v323 = vld [vmem:[%s6 + $0x14] sm:$0xf]
    %v324 = vld [vmem:[#allocation8] sm:$0x1]
    %v326 = vlaneseq
    %v327 = vshrl.u32 %v326, 7
    %v328 = vsub.s32 0, %v327
    %v329 = vrot.slane %v324, %v328
    %v337 = vunpack.c.l.b16 %v318
    %v338 = vunpack.c.l.b16 %v319
    %v339 = vunpack.c.l.b16 %v320
    %v340 = vunpack.c.l.b16 %v321
    %v341 = vunpack.c.l.b16 %v322
    %v342 = vunpack.c.l.b16 %v323
    %v343 = vpack.c.b16 %v338, %v337
    %v344 = vpack.c.b16 %v340, %v339
    %v345 = vpack.c.b16 %v342, %v341
    %vm349 = vcmask 392192
    %v351 = vsel %vm349, %v317, 0
    %353 = vmatprep.subr.bf16.mxu0 0
    %354 = vmatpush1.bf16.msra.mxu0 %v343
    %355 = vmatprep.subr.bf16.mxu0 0
    %356 = vmatpush1.bf16.msra.mxu0 %v344
    %357 = vmatprep.subr.bf16.mxu0 0
    %358 = vmatpush1.bf16.msra.mxu0 %v345
    %359 = vmatprep.subr.bf16.mxu0 0
    %360 = vmatpush1.bf16.msra.mxu0 0
    %361 = vmatprep.subr.bf16.mxu0 0
    %362 = vmatpush1.bf16.msra.mxu0 0
    %363 = vmatprep.subr.bf16.mxu0 0
    %364 = vmatpush1.bf16.msra.mxu0 0
    %365 = vmatprep.subr.bf16.mxu0 0
    %366 = vmatpush1.bf16.msra.mxu0 0
    %367 = vmatprep.subr.bf16.mxu0 0
    %368 = vmatpush1.bf16.msra.mxu0 0
    %369 = vmatprep.subr.bf16.mxu0 0
    %370 = vmatpush1.bf16.msra.mxu0 0
    %371 = vmatprep.subr.bf16.mxu0 0
    %372 = vmatpush1.bf16.msra.mxu0 0
    %373 = vmatprep.subr.bf16.mxu0 0
    %374 = vmatpush1.bf16.msra.mxu0 0
    %375 = vmatprep.subr.bf16.mxu0 0
    %376 = vmatpush1.bf16.msra.mxu0 0
    %377 = vmatprep.subr.bf16.mxu0 0
    %378 = vmatpush1.bf16.msra.mxu0 0
    %379 = vmatprep.subr.bf16.mxu0 0
    %380 = vmatpush1.bf16.msra.mxu0 0
    %381 = vmatprep.subr.bf16.mxu0 0
    %382 = vmatpush1.bf16.msra.mxu0 0
    %383 = vmatprep.subr.bf16.mxu0 0
    %384 = vmatpush1.bf16.msra.mxu0 0
    %385 = vmatprep.mubr.bf16.mxu0 0
    %386 = vmatmul.mubr.bf16.gmra.mrb[0].mxu0 %v351
    %v387 = vpop.f32.mrb[0].mxu0
    %v388 = vadd.f32 %v329, %v387
    %v389 = vpop.f32.mrb[0].mxu0
    %v390 = vpop.f32.mrb[0].mxu0
    %v391 = vpop.f32.mrb[0].mxu0
    %392 = vdwg.mxu0
    %v393 = vmax.f32 %v388, 0.0
    %v394 = vpack.c.bf16 %v393, %v393
    %v395 = vld [vmem:[%s8] sm:$0xf]
    %v396 = vld [vmem:[%s8 + $0x4] sm:$0xf]
    %v397 = vld [vmem:[%s8 + $0x8] sm:$0xf]
    %v398 = vld [vmem:[%s8 + $0xc] sm:$0xf]
    %v399 = vld [vmem:[#allocation10] sm:$0x1]
    %v401 = vlaneseq
    %v402 = vshrl.u32 %v401, 7
    %v403 = vsub.s32 0, %v402
    %v404 = vrot.slane %v399, %v403
    %v410 = vunpack.c.l.b16 %v395
    %v411 = vunpack.c.l.b16 %v396
    %v412 = vunpack.c.l.b16 %v397
    %v413 = vunpack.c.l.b16 %v398
    %v414 = vpack.c.b16 %v411, %v410
    %v415 = vpack.c.b16 %v413, %v412
    %vm418 = vcmask 261120
    %v420 = vsel %vm418, %v394, 0
    %422 = vmatprep.subr.bf16.mxu0 0
    %423 = vmatpush1.bf16.msra.mxu0 %v414
    %424 = vmatprep.subr.bf16.mxu0 0
    %425 = vmatpush1.bf16.msra.mxu0 %v415
    %426 = vmatprep.subr.bf16.mxu0 0
    %427 = vmatpush1.bf16.msra.mxu0 0
    %428 = vmatprep.subr.bf16.mxu0 0
    %429 = vmatpush1.bf16.msra.mxu0 0
    %430 = vmatprep.subr.bf16.mxu0 0
    %431 = vmatpush1.bf16.msra.mxu0 0
    %432 = vmatprep.subr.bf16.mxu0 0
    %433 = vmatpush1.bf16.msra.mxu0 0
    %434 = vmatprep.subr.bf16.mxu0 0
    %435 = vmatpush1.bf16.msra.mxu0 0
    %436 = vmatprep.subr.bf16.mxu0 0
    %437 = vmatpush1.bf16.msra.mxu0 0
    %438 = vmatprep.subr.bf16.mxu0 0
    %439 = vmatpush1.bf16.msra.mxu0 0
    %440 = vmatprep.subr.bf16.mxu0 0
    %441 = vmatpush1.bf16.msra.mxu0 0
    %442 = vmatprep.subr.bf16.mxu0 0
    %443 = vmatpush1.bf16.msra.mxu0 0
    %444 = vmatprep.subr.bf16.mxu0 0
    %445 = vmatpush1.bf16.msra.mxu0 0
    %446 = vmatprep.subr.bf16.mxu0 0
    %447 = vmatpush1.bf16.msra.mxu0 0
    %448 = vmatprep.subr.bf16.mxu0 0
    %449 = vmatpush1.bf16.msra.mxu0 0
    %450 = vmatprep.subr.bf16.mxu0 0
    %451 = vmatpush1.bf16.msra.mxu0 0
    %452 = vmatprep.subr.bf16.mxu0 0
    %453 = vmatpush1.bf16.msra.mxu0 0
    %454 = vmatprep.mubr.bf16.mxu0 0
    %455 = vmatmul.mubr.bf16.gmra.mrb[0].mxu0 %v420
    %v456 = vpop.f32.mrb[0].mxu0
    %v457 = vadd.f32 %v404, %v456
    %v458 = vpop.f32.mrb[0].mxu0
    %v459 = vpop.f32.mrb[0].mxu0
    %v460 = vpop.f32.mrb[0].mxu0
    %461 = vdwg.mxu0
    %v462 = vmax.f32 %v457, 0.0
    %v463 = vpack.c.bf16 %v462, %v462
    %v464 = vld [vmem:[%s10] sm:$0xf]
    %v465 = vld [vmem:[%s10 + $0x4] sm:$0xf]
    %v466 = vld [vmem:[#allocation11] sm:$0x1]
    %v468 = vlaneseq
    %v469 = vshrl.u32 %v468, 7
    %v470 = vsub.s32 0, %v469
    %v471 = vrot.slane %v466, %v470
    %v475 = vunpack.c.l.b16 %v464
    %v476 = vunpack.c.l.b16 %v465
    %v477 = vpack.c.b16 %v476, %v475
    %vm479 = vcmask 130048
    %v481 = vsel %vm479, %v463, 0
    %483 = vmatprep.subr.bf16.mxu0 0
    %484 = vmatpush1.bf16.msra.mxu0 %v477
    %485 = vmatprep.subr.bf16.mxu0 0
    %486 = vmatpush1.bf16.msra.mxu0 0
    %487 = vmatprep.subr.bf16.mxu0 0
    %488 = vmatpush1.bf16.msra.mxu0 0
    %489 = vmatprep.subr.bf16.mxu0 0
    %490 = vmatpush1.bf16.msra.mxu0 0
    %491 = vmatprep.subr.bf16.mxu0 0
    %492 = vmatpush1.bf16.msra.mxu0 0
    %493 = vmatprep.subr.bf16.mxu0 0
    %494 = vmatpush1.bf16.msra.mxu0 0
    %495 = vmatprep.subr.bf16.mxu0 0
    %496 = vmatpush1.bf16.msra.mxu0 0
    %497 = vmatprep.subr.bf16.mxu0 0
    %498 = vmatpush1.bf16.msra.mxu0 0
    %499 = vmatprep.subr.bf16.mxu0 0
    %500 = vmatpush1.bf16.msra.mxu0 0
    %501 = vmatprep.subr.bf16.mxu0 0
    %502 = vmatpush1.bf16.msra.mxu0 0
    %503 = vmatprep.subr.bf16.mxu0 0
    %504 = vmatpush1.bf16.msra.mxu0 0
    %505 = vmatprep.subr.bf16.mxu0 0
    %506 = vmatpush1.bf16.msra.mxu0 0
    %507 = vmatprep.subr.bf16.mxu0 0
    %508 = vmatpush1.bf16.msra.mxu0 0
    %509 = vmatprep.subr.bf16.mxu0 0
    %510 = vmatpush1.bf16.msra.mxu0 0
    %511 = vmatprep.subr.bf16.mxu0 0
    %512 = vmatpush1.bf16.msra.mxu0 0
    %513 = vmatprep.subr.bf16.mxu0 0
    %514 = vmatpush1.bf16.msra.mxu0 0
    %515 = vmatprep.mubr.bf16.mxu0 0
    %516 = vmatmul.mubr.bf16.gmra.mrb[0].mxu0 %v481
    %v517 = vpop.f32.mrb[0].mxu0
    %v518 = vadd.f32 %v471, %v517
    %v519 = vpop.f32.mrb[0].mxu0
    %v520 = vpop.f32.mrb[0].mxu0
    %v521 = vpop.f32.mrb[0].mxu0
    %522 = vdwg.mxu0
    %v523 = vld [vmem:[#allocation5] sm:$0xff]
    %v524 = vmul.f32 %v518, 0.5
    %v525 = vmul.f32 %v524, 1.442695
    %v526 = vpow.pop %v525
    %528 = vrot.lane.b32.xlu0 %v526, 120
    %v529 = vpop.permute.xlu0 %528
    %v531 = vmul.f32 %v523, %v529
    %v532 = vadd.f32 %v518, %v531
    %v533 = vpack.c.bf16 %v532, %v532
    %v534 = vld [vmem:[%s12] sm:$0xf]
    %v535 = vld [vmem:[%s13] sm:$0x1]
    %v537 = vlaneseq
    %v538 = vshrl.u32 %v537, 7
    %v539 = vsub.s32 0, %v538
    %v540 = vrot.slane %v535, %v539
    %vm542 = vcmask 64512
    %v544 = vsel %vm542, %v533, 0
    %vm546 = vcmask 1043456
    %v548 = vsel %vm546, %v534, 0
    %550 = vmatprep.subr.bf16.mxu0 0
    %551 = vmatpush1.bf16.msra.mxu0 %v548
    %552 = vmatprep.subr.bf16.mxu0 0
    %553 = vmatpush1.bf16.msra.mxu0 0
    %554 = vmatprep.subr.bf16.mxu0 0
    %555 = vmatpush1.bf16.msra.mxu0 0
    %556 = vmatprep.subr.bf16.mxu0 0
    %557 = vmatpush1.bf16.msra.mxu0 0
    %558 = vmatprep.subr.bf16.mxu0 0
    %559 = vmatpush1.bf16.msra.mxu0 0
    %560 = vmatprep.subr.bf16.mxu0 0
    %561 = vmatpush1.bf16.msra.mxu0 0
    %562 = vmatprep.subr.bf16.mxu0 0
    %563 = vmatpush1.bf16.msra.mxu0 0
    %564 = vmatprep.subr.bf16.mxu0 0
    %565 = vmatpush1.bf16.msra.mxu0 0
    %566 = vmatprep.subr.bf16.mxu0 0
    %567 = vmatpush1.bf16.msra.mxu0 0
    %568 = vmatprep.subr.bf16.mxu0 0
    %569 = vmatpush1.bf16.msra.mxu0 0
    %570 = vmatprep.subr.bf16.mxu0 0
    %571 = vmatpush1.bf16.msra.mxu0 0
    %572 = vmatprep.subr.bf16.mxu0 0
    %573 = vmatpush1.bf16.msra.mxu0 0
    %574 = vmatprep.subr.bf16.mxu0 0
    %575 = vmatpush1.bf16.msra.mxu0 0
    %576 = vmatprep.subr.bf16.mxu0 0
    %577 = vmatpush1.bf16.msra.mxu0 0
    %578 = vmatprep.subr.bf16.mxu0 0
    %579 = vmatpush1.bf16.msra.mxu0 0
    %580 = vmatprep.subr.bf16.mxu0 0
    %581 = vmatpush1.bf16.msra.mxu0 0
    %582 = vmatprep.mubr.bf16.mxu0 0
    %583 = vmatmul.mubr.bf16.gmra.mrb[0].mxu0 %v544
    %v584 = vpop.f32.mrb[0].mxu0
    %v585 = vadd.f32 %v540, %v584
    %v586 = vpop.f32.mrb[0].mxu0
    %v587 = vpop.f32.mrb[0].mxu0
    %v588 = vpop.f32.mrb[0].mxu0
    %589 = vdwg.mxu0
    %v590 = vmax.f32 %v585, 0.0
    %v591 = vpack.c.bf16 %v590, %v590
    %v592 = vld [vmem:[%s14] sm:$0xf]
    %v593 = vld [vmem:[%s14 + $0x4] sm:$0xf]
    %v594 = vld [vmem:[%s15] sm:$0x1]
    %v596 = vlaneseq
    %v597 = vshrl.u32 %v596, 7
    %v598 = vsub.s32 0, %v597
    %v599 = vrot.slane %v594, %v598
    %v603 = vunpack.c.l.b16 %v592
    %v604 = vunpack.c.l.b16 %v593
    %v605 = vpack.c.b16 %v604, %v603
    %v608 = vsel %vm479, %v591, 0
    %610 = vmatprep.subr.bf16.mxu0 0
    %611 = vmatpush1.bf16.msra.mxu0 %v605
    %612 = vmatprep.subr.bf16.mxu0 0
    %613 = vmatpush1.bf16.msra.mxu0 0
    %614 = vmatprep.subr.bf16.mxu0 0
    %615 = vmatpush1.bf16.msra.mxu0 0
    %616 = vmatprep.subr.bf16.mxu0 0
    %617 = vmatpush1.bf16.msra.mxu0 0
    %618 = vmatprep.subr.bf16.mxu0 0
    %619 = vmatpush1.bf16.msra.mxu0 0
    %620 = vmatprep.subr.bf16.mxu0 0
    %621 = vmatpush1.bf16.msra.mxu0 0
    %622 = vmatprep.subr.bf16.mxu0 0
    %623 = vmatpush1.bf16.msra.mxu0 0
    %624 = vmatprep.subr.bf16.mxu0 0
    %625 = vmatpush1.bf16.msra.mxu0 0
    %626 = vmatprep.subr.bf16.mxu0 0
    %627 = vmatpush1.bf16.msra.mxu0 0
    %628 = vmatprep.subr.bf16.mxu0 0
    %629 = vmatpush1.bf16.msra.mxu0 0
    %630 = vmatprep.subr.bf16.mxu0 0
    %631 = vmatpush1.bf16.msra.mxu0 0
    %632 = vmatprep.subr.bf16.mxu0 0
    %633 = vmatpush1.bf16.msra.mxu0 0
    %634 = vmatprep.subr.bf16.mxu0 0
    %635 = vmatpush1.bf16.msra.mxu0 0
    %636 = vmatprep.subr.bf16.mxu0 0
    %637 = vmatpush1.bf16.msra.mxu0 0
    %638 = vmatprep.subr.bf16.mxu0 0
    %639 = vmatpush1.bf16.msra.mxu0 0
    %640 = vmatprep.subr.bf16.mxu0 0
    %641 = vmatpush1.bf16.msra.mxu0 0
    %642 = vmatprep.mubr.bf16.mxu0 0
    %643 = vmatmul.mubr.bf16.gmra.mrb[0].mxu0 %v608
    %v644 = vpop.f32.mrb[0].mxu0
    %v645 = vadd.f32 %v599, %v644
    %v646 = vpop.f32.mrb[0].mxu0
    %v647 = vpop.f32.mrb[0].mxu0
    %v648 = vpop.f32.mrb[0].mxu0
    %649 = vdwg.mxu0
    %v650 = vmax.f32 %v645, 0.0
    %v651 = vpack.c.bf16 %v650, %v650
    %v652 = vld [vmem:[%s16] sm:$0xf]
    %v653 = vld [vmem:[%s16 + $0x4] sm:$0xf]
    %v654 = vld [vmem:[%s16 + $0x8] sm:$0xf]
    %v655 = vld [vmem:[%s16 + $0xc] sm:$0xf]
    %v656 = vld [vmem:[%s17] sm:$0x1]
    %v658 = vlaneseq
    %v659 = vshrl.u32 %v658, 7
    %v660 = vsub.s32 0, %v659
    %v661 = vrot.slane %v656, %v660
    %v667 = vunpack.c.l.b16 %v652
    %v668 = vunpack.c.l.b16 %v653
    %v669 = vunpack.c.l.b16 %v654
    %v670 = vunpack.c.l.b16 %v655
    %v671 = vpack.c.b16 %v668, %v667
    %v672 = vpack.c.b16 %v670, %v669
    %v676 = vsel %vm418, %v651, 0
    %678 = vmatprep.subr.bf16.mxu0 0
    %679 = vmatpush1.bf16.msra.mxu0 %v671
    %680 = vmatprep.subr.bf16.mxu0 0
    %681 = vmatpush1.bf16.msra.mxu0 %v672
    %682 = vmatprep.subr.bf16.mxu0 0
    %683 = vmatpush1.bf16.msra.mxu0 0
    %684 = vmatprep.subr.bf16.mxu0 0
    %685 = vmatpush1.bf16.msra.mxu0 0
    %686 = vmatprep.subr.bf16.mxu0 0
    %687 = vmatpush1.bf16.msra.mxu0 0
    %688 = vmatprep.subr.bf16.mxu0 0
    %689 = vmatpush1.bf16.msra.mxu0 0
    %690 = vmatprep.subr.bf16.mxu0 0
    %691 = vmatpush1.bf16.msra.mxu0 0
    %692 = vmatprep.subr.bf16.mxu0 0
    %693 = vmatpush1.bf16.msra.mxu0 0
    %694 = vmatprep.subr.bf16.mxu0 0
    %695 = vmatpush1.bf16.msra.mxu0 0
    %696 = vmatprep.subr.bf16.mxu0 0
    %697 = vmatpush1.bf16.msra.mxu0 0
    %698 = vmatprep.subr.bf16.mxu0 0
    %699 = vmatpush1.bf16.msra.mxu0 0
    %700 = vmatprep.subr.bf16.mxu0 0
    %701 = vmatpush1.bf16.msra.mxu0 0
    %702 = vmatprep.subr.bf16.mxu0 0
    %703 = vmatpush1.bf16.msra.mxu0 0
    %704 = vmatprep.subr.bf16.mxu0 0
    %705 = vmatpush1.bf16.msra.mxu0 0
    %706 = vmatprep.subr.bf16.mxu0 0
    %707 = vmatpush1.bf16.msra.mxu0 0
    %708 = vmatprep.subr.bf16.mxu0 0
    %709 = vmatpush1.bf16.msra.mxu0 0
    %710 = vmatprep.mubr.bf16.mxu0 0
    %711 = vmatmul.mubr.bf16.gmra.mrb[0].mxu0 %v676
    %v712 = vpop.f32.mrb[0].mxu0
    %v713 = vadd.f32 %v661, %v712
    %v714 = vpop.f32.mrb[0].mxu0
    %v715 = vpop.f32.mrb[0].mxu0
    %v716 = vpop.f32.mrb[0].mxu0
    %717 = vdwg.mxu0
    %v718 = vmax.f32 %v713, 0.0
    %v719 = vpack.c.bf16 %v718, %v718
    %v720 = vld [vmem:[%s18] sm:$0xf]
    %v721 = vld [vmem:[%s18 + $0x4] sm:$0xf]
    %v722 = vld [vmem:[%s18 + $0x8] sm:$0xf]
    %v723 = vld [vmem:[%s18 + $0xc] sm:$0xf]
    %v724 = vld [vmem:[%s18 + $0x10] sm:$0xf]
    %v725 = vld [vmem:[%s18 + $0x14] sm:$0xf]
    %v726 = vld [vmem:[%s19] sm:$0x1]
    %v728 = vlaneseq
    %v729 = vshrl.u32 %v728, 7
    %v730 = vsub.s32 0, %v729
    %v731 = vrot.slane %v726, %v730
    %v739 = vunpack.c.l.b16 %v720
    %v740 = vunpack.c.l.b16 %v721
    %v741 = vunpack.c.l.b16 %v722
    %v742 = vunpack.c.l.b16 %v723
    %v743 = vunpack.c.l.b16 %v724
    %v744 = vunpack.c.l.b16 %v725
    %v745 = vpack.c.b16 %v740, %v739
    %v746 = vpack.c.b16 %v742, %v741
    %v747 = vpack.c.b16 %v744, %v743
    %v752 = vsel %vm349, %v719, 0
    %754 = vmatprep.subr.bf16.mxu0 0
    %755 = vmatpush1.bf16.msra.mxu0 %v745
    %756 = vmatprep.subr.bf16.mxu0 0
    %757 = vmatpush1.bf16.msra.mxu0 %v746
    %758 = vmatprep.subr.bf16.mxu0 0
    %759 = vmatpush1.bf16.msra.mxu0 %v747
    %760 = vmatprep.subr.bf16.mxu0 0
    %761 = vmatpush1.bf16.msra.mxu0 0
    %762 = vmatprep.subr.bf16.mxu0 0
    %763 = vmatpush1.bf16.msra.mxu0 0
    %764 = vmatprep.subr.bf16.mxu0 0
    %765 = vmatpush1.bf16.msra.mxu0 0
    %766 = vmatprep.subr.bf16.mxu0 0
    %767 = vmatpush1.bf16.msra.mxu0 0
    %768 = vmatprep.subr.bf16.mxu0 0
    %769 = vmatpush1.bf16.msra.mxu0 0
    %770 = vmatprep.subr.bf16.mxu0 0
    %771 = vmatpush1.bf16.msra.mxu0 0
    %772 = vmatprep.subr.bf16.mxu0 0
    %773 = vmatpush1.bf16.msra.mxu0 0
    %774 = vmatprep.subr.bf16.mxu0 0
    %775 = vmatpush1.bf16.msra.mxu0 0
    %776 = vmatprep.subr.bf16.mxu0 0
    %777 = vmatpush1.bf16.msra.mxu0 0
    %778 = vmatprep.subr.bf16.mxu0 0
    %779 = vmatpush1.bf16.msra.mxu0 0
    %780 = vmatprep.subr.bf16.mxu0 0
    %781 = vmatpush1.bf16.msra.mxu0 0
    %782 = vmatprep.subr.bf16.mxu0 0
    %783 = vmatpush1.bf16.msra.mxu0 0
    %784 = vmatprep.subr.bf16.mxu0 0
    %785 = vmatpush1.bf16.msra.mxu0 0
    %786 = vmatprep.mubr.bf16.mxu0 0
    %787 = vmatmul.mubr.bf16.gmra.mrb[0].mxu0 %v752
    %v788 = vpop.f32.mrb[0].mxu0
    %v789 = vadd.f32 %v731, %v788
    %v790 = vpop.f32.mrb[0].mxu0
    %v791 = vpop.f32.mrb[0].mxu0
    %v792 = vpop.f32.mrb[0].mxu0
    %793 = vdwg.mxu0
    %v794 = vmax.f32 %v789, 0.0
    %v795 = vpack.c.bf16 %v794, %v794
    %v796 = vld [vmem:[%s20] sm:$0xf]
    %v797 = vld [vmem:[%s20 + $0x4] sm:$0xf]
    %v798 = vld [vmem:[%s20 + $0x8] sm:$0xf]
    %v799 = vld [vmem:[%s20 + $0xc] sm:$0xf]
    %v800 = vld [vmem:[%s20 + $0x10] sm:$0xf]
    %v801 = vld [vmem:[%s20 + $0x14] sm:$0xf]
    %v802 = vld [vmem:[%s20 + $0x18] sm:$0xf]
    %v803 = vld [vmem:[%s20 + $0x1c] sm:$0xf]
    %v804 = vld [vmem:[%s21] sm:$0x1]
    %v806 = vlaneseq
    %v807 = vshrl.u32 %v806, 7
    %v808 = vsub.s32 0, %v807
    %v809 = vrot.slane %v804, %v808
    %v819 = vunpack.c.l.b16 %v796
    %v820 = vunpack.c.l.b16 %v797
    %v821 = vunpack.c.l.b16 %v798
    %v822 = vunpack.c.l.b16 %v799
    %v823 = vunpack.c.l.b16 %v800
    %v824 = vunpack.c.l.b16 %v801
    %v825 = vunpack.c.l.b16 %v802
    %v826 = vunpack.c.l.b16 %v803
    %v827 = vpack.c.b16 %v820, %v819
    %v828 = vpack.c.b16 %v822, %v821
    %v829 = vpack.c.b16 %v824, %v823
    %v830 = vpack.c.b16 %v826, %v825
    %v836 = vsel %vm272, %v795, 0
    %838 = vmatprep.subr.bf16.mxu0 0
    %839 = vmatpush1.bf16.msra.mxu0 %v827
    %840 = vmatprep.subr.bf16.mxu0 0
    %841 = vmatpush1.bf16.msra.mxu0 %v828
    %842 = vmatprep.subr.bf16.mxu0 0
    %843 = vmatpush1.bf16.msra.mxu0 %v829
    %844 = vmatprep.subr.bf16.mxu0 0
    %845 = vmatpush1.bf16.msra.mxu0 %v830
    %846 = vmatprep.subr.bf16.mxu0 0
    %847 = vmatpush1.bf16.msra.mxu0 0
    %848 = vmatprep.subr.bf16.mxu0 0
    %849 = vmatpush1.bf16.msra.mxu0 0
    %850 = vmatprep.subr.bf16.mxu0 0
    %851 = vmatpush1.bf16.msra.mxu0 0
    %852 = vmatprep.subr.bf16.mxu0 0
    %853 = vmatpush1.bf16.msra.mxu0 0
    %854 = vmatprep.subr.bf16.mxu0 0
    %855 = vmatpush1.bf16.msra.mxu0 0
    %856 = vmatprep.subr.bf16.mxu0 0
    %857 = vmatpush1.bf16.msra.mxu0 0
    %858 = vmatprep.subr.bf16.mxu0 0
    %859 = vmatpush1.bf16.msra.mxu0 0
    %860 = vmatprep.subr.bf16.mxu0 0
    %861 = vmatpush1.bf16.msra.mxu0 0
    %862 = vmatprep.subr.bf16.mxu0 0
    %863 = vmatpush1.bf16.msra.mxu0 0
    %864 = vmatprep.subr.bf16.mxu0 0
    %865 = vmatpush1.bf16.msra.mxu0 0
    %866 = vmatprep.subr.bf16.mxu0 0
    %867 = vmatpush1.bf16.msra.mxu0 0
    %868 = vmatprep.subr.bf16.mxu0 0
    %869 = vmatpush1.bf16.msra.mxu0 0
    %870 = vmatprep.mubr.bf16.mxu0 0
    %871 = vmatmul.mubr.bf16.gmra.mrb[0].mxu0 %v836
    %v872 = vpop.f32.mrb[0].mxu0
    %v873 = vadd.f32 %v809, %v872
    %v874 = vpop.f32.mrb[0].mxu0
    %v875 = vpop.f32.mrb[0].mxu0
    %v876 = vpop.f32.mrb[0].mxu0
    %877 = vdwg.mxu0
    %878 = vst [vmem:[#allocation13] sm:$0xff] %v873
    %880 = vrot.lane.b32.xlu0 %v532, 16
    %v881 = vpop.permute.xlu0 %880
    %v883 = vsel %vm479, %v518, %v881
    %vm884 = vcmask 195584
    %v885 = vsel %vm884, %v883, 0.0
    %886 = vst [vmem:[#allocation14] sm:$0xff] %v885
    // Predicated region
    $region114: #{tpu_custom_call.1} parent=1 // pred_check
      _
    $region115: #{tpu_custom_call.1} parent=1 // pred_check_branch
      %888 = sbr.rel (0) target = $region117
    $region116: #{tpu_custom_call.1} parent=1 // pred_region
      %s890 = ssub.s32 128, 128
      %891 = vsyncadd [#allocation4], %s890
      %s893 = sshll.u32 [#allocation13], 4
      %s894 = int_to_ptr.vmem [resolvable:$true] %s893
      %896 = dma.vmem_to_hbm [thread:$0]  %s894, 128, %s22, [#allocation4]
    $region117: #{tpu_custom_call.1} parent=1 // pred_fallthru
      _
    // Predicated region
    $region118: #{tpu_custom_call.1} parent=1 // pred_check
      _
    $region119: #{tpu_custom_call.1} parent=1 // pred_check_branch
      %898 = sbr.rel (0) target = $region121
    $region120: #{tpu_custom_call.1} parent=1 // pred_region
      %s900 = ssub.s32 128, 128
      %901 = vsyncadd [#allocation15], %s900
      %s903 = sshll.u32 [#allocation14], 4
      %s904 = int_to_ptr.vmem [resolvable:$true] %s903
      %906 = dma.vmem_to_hbm [thread:$0]  %s904, 128, %s23, [#allocation15]
    $region121: #{tpu_custom_call.1} parent=1 // pred_fallthru
      _
    // Predicated region
    $region122: #{tpu_custom_call.1} parent=1 // pred_check
      _
    $region123: #{tpu_custom_call.1} parent=1 // pred_check_branch
      %908 = sbr.rel (0) target = $region125
    $region124: #{tpu_custom_call.1} parent=1 // pred_region
      %909 = dma.done [#allocation4], 128
    $region125: #{tpu_custom_call.1} parent=1 // pred_fallthru
      _
    // Predicated region
    $region126: #{tpu_custom_call.1} parent=1 // pred_check
      _
    $region127: #{tpu_custom_call.1} parent=1 // pred_check_branch
      %911 = sbr.rel (0) target = $region129
    $region128: #{tpu_custom_call.1} parent=1 // pred_region
      %912 = dma.done [#allocation15], 128
    $region129: #{tpu_custom_call.1} parent=1 // pred_fallthru
      _
    %913 = vsyncpa [#allocation3], 1
    %914 = vsyncpa [#allocation6], 1
    %915 = vsyncpa [#allocation9], 1
    %916 = vsyncpa [#allocation12], 1
    %917 = vsyncpa [#allocation4], 1
    %918 = vsyncpa [#allocation15], 1

</llo_original>
